<compile_context>
chip_gen: v5e
topology: v5e:2x2
jax: 0.10.0
libtpu: 0.0.40
codegen_flags: <defaults>
</compile_context>

<pallas_src>
import functools

import jax
import jax.numpy as jnp
from jax import lax
from jax.experimental import pallas as pl
from jax.experimental.pallas import tpu as pltpu


def _round_up(x: int, m: int) -> int:
    return ((x + m - 1) // m) * m


def _default_vmem_limits():
    """Generation-aware (planning budget, scoped limit) in bytes."""
    try:
        cap = int(pltpu.get_tpu_info().vmem_capacity_bytes)
    except Exception:
        cap = 64 * 1024 * 1024                      # conservative (v7x-like) fallback
    budget = min(cap // 4, 32 * 1024 * 1024)        # what the auto-tiler plans against
    limit = min(cap // 2, 64 * 1024 * 1024)         # cap handed to Mosaic (2x headroom)
    return budget, limit


# ---------------------------------------------------------------------------
# Kernels
# ---------------------------------------------------------------------------
def _dense_group_kernel(x_ref, w_ref, o_ref, *, dg, n_ary, emb_dim):
    # x_ref: (Bt, dg, n_ary) compute dtype ; w_ref: (dg, Vb, E) ; o_ref: (Bt, dg*E)
    w_dtype = w_ref.dtype
    for i in range(dg):                                   # static unroll over digits
        w_d = w_ref[i, :n_ary, :]                         # ref slice: only n_ary rows to vregs
        x_d = x_ref[:, i, :]
        if x_d.dtype != w_dtype:
            x_d = x_d.astype(w_dtype)
        y = jnp.dot(x_d, w_d, preferred_element_type=jnp.float32)
        # Direct static slice store: bounds the live set to one digit (no concat).
        o_ref[:, i * emb_dim:(i + 1) * emb_dim] = y.astype(o_ref.dtype)


def _sparse_group_kernel(idx_ref, w_ref, o_ref, *, dg, emb_dim):
    # idx_ref: (1, Bt, dg) int32 ; w_ref: (dg, V, E) ; o_ref: (Bt, dg*E)
    # NOTE: out-of-range indices yield an all-zero row (no bounds error, unlike
    #       torch.nn.Embedding); callers must guarantee valid indices.
    bt = idx_ref.shape[1]
    vocab = w_ref.shape[1]
    w_dtype = w_ref.dtype
    idx = idx_ref[0]                                              # (Bt, dg)
    # Hoisted, loop-invariant iota (JAX does not CSE broadcast_in_dim).
    iota = lax.broadcasted_iota(jnp.int32, (bt, vocab), 1)
    for i in range(dg):                                           # static unroll
        onehot = (idx[:, i:i + 1] == iota).astype(w_dtype)        # (Bt, V) in MXU dtype
        y = jnp.dot(onehot, w_ref[i], preferred_element_type=jnp.float32)
        o_ref[:, i * emb_dim:(i + 1) * emb_dim] = y.astype(o_ref.dtype)


# ---------------------------------------------------------------------------
# Module wrapper
# ---------------------------------------------------------------------------
class PositionAwareEmbeddingPallas:
    def __init__(self, n_seq_len, num_embeddings, embedding_dim, key,
                 lower=-0.1, upper=0.1, weight_dtype=jnp.float32,
                 out_dtype=jnp.float32, digits_per_group=None, batch_tile=None,
                 vmem_budget_bytes=None, vmem_limit_bytes=None):
        self.n_seq_len = n_seq_len
        self.num_embeddings = num_embeddings
        self.embedding_dim = embedding_dim
        self.weight_dtype = weight_dtype
        self.compute_dtype = weight_dtype          # x is cast to this (bf16 weights -> bf16 x)
        self.out_dtype = out_dtype
        self.digits_per_group = digits_per_group
        self.batch_tile = batch_tile
        budget, limit = _default_vmem_limits()
        self.vmem_budget_bytes = vmem_budget_bytes or budget
        self.vmem_limit_bytes = vmem_limit_bytes or limit
        n_tables = n_seq_len if isinstance(n_seq_len, int) else 1
        # nn.ModuleList of nn.Embedding (or one shared nn.Embedding) -> stacked table,
        # init_weights(uniform lower..upper).
        self.weights = jax.random.uniform(
            key, (n_tables, num_embeddings, embedding_dim),
            minval=lower, maxval=upper, dtype=jnp.float32).astype(weight_dtype)

    # ---- tiling / planning -------------------------------------------------
    def _pick_dg(self, d_tables, weight_vrows, per_row_bytes_fn):
        emb = self.embedding_dim
        itemw = jnp.dtype(self.weight_dtype).itemsize
        if self.digits_per_group is not None and d_tables > 1:
            dg = self.digits_per_group
            assert d_tables % dg == 0, "digits_per_group must divide n_seq_len"
            assert dg == d_tables or (dg % 8 == 0 and (dg * emb) % 128 == 0), (
                "digits_per_group must be n_seq_len, or a multiple of 8 with "
                "digits_per_group*embedding_dim a multiple of 128")
            return dg
        cands = [d_tables] + [d for d in range(d_tables - 1, 0, -1)
                              if d_tables % d == 0 and d % 8 == 0 and (d * emb) % 128 == 0]
        for dg in cands:
            w_bytes = 2 * dg * _round_up(weight_vrows, 8) * _round_up(emb, 128) * itemw
            if w_bytes + 8 * per_row_bytes_fn(dg) <= self.vmem_budget_bytes:
                return dg
        # TODO(synk): K-tiled accumulation / DMA row-gather when one digit's table exceeds VMEM.
        return cands[-1]

    def _pick_batch_tile(self, n_rows, per_row_bytes, fixed_bytes):
        target = self.batch_tile if self.batch_tile is not None else 256
        if n_rows <= 8:
            return n_rows
        budget = max(self.vmem_budget_bytes - fixed_bytes, 8 * per_row_bytes)
        if n_rows <= target and _round_up(n_rows, 8) * per_row_bytes <= budget:
            return n_rows                              # one block == full dim (always legal)
        bt = min((max(target, 8) // 8) * 8, _round_up(n_rows, 8))
        while bt > 8 and bt * per_row_bytes > budget:
            bt -= 8
        for b in range(bt, 7, -8):                     # prefer a tile that divides n_rows
            if n_rows % b == 0:
                return b
        return bt                                      # non-dividing: padded edge block

    def _grid_order(self, n_groups, n_btiles):
        # Returns (grid, dimension_semantics, batch_leading).
        if n_groups == 1:
            # Batch-leading parallel axis: v7x megacore shards batch tiles across both TCs;
            # the single weight block stays resident across every step.
            return (n_btiles, n_groups), ("parallel", "arbitrary"), True
        # Group-leading: each weight block is DMA'd once and stays resident across all
        # batch tiles of its group (total weight HBM traffic == table size).
        return (n_groups, n_btiles), ("arbitrary", "parallel"), False

    def _compiler_params(self, dims):
        return pltpu.CompilerParams(
            dimension_semantics=dims,
            vmem_limit_bytes=self.vmem_limit_bytes)

    # ---- dense path: x3 (n_rows, d_tables, n_ary) float ---------------------
    def _dense_call(self, x3):
        n_rows, d_tables, n_ary = x3.shape
        num_tables, vocab, emb = self.weights.shape
        assert d_tables == num_tables
        x3 = x3.astype(self.compute_dtype)

        vb = min(_round_up(n_ary, 8), vocab)           # weight rows actually DMA'd per digit
        itemx = jnp.dtype(self.compute_dtype).itemsize
        itemw = jnp.dtype(self.weight_dtype).itemsize
        itemo = jnp.dtype(self.out_dtype).itemsize

        def per_row(dg):                               # padded VMEM bytes per batch row
            return (2 * _round_up(dg, 8) * _round_up(n_ary, 128) * itemx
                    + 2 * _round_up(dg * emb, 128) * itemo
                    + _round_up(emb, 128) * 4)         # in-kernel per-digit f32 result

        dg = self._pick_dg(num_tables, vb, per_row)
        n_groups = num_tables // dg
        w_block_bytes = 2 * dg * _round_up(vb, 8) * _round_up(emb, 128) * itemw
        bt = self._pick_batch_tile(n_rows, per_row(dg), w_block_bytes)
        n_btiles = (n_rows + bt - 1) // bt
        grid, dims, batch_leading = self._grid_order(n_groups, n_btiles)

        if batch_leading:
            x_map = lambda b, g: (b, g, 0)
            w_map = lambda b, g: (g, 0, 0)
            o_map = lambda b, g: (b, g)
        else:
            x_map = lambda g, b: (b, g, 0)
            w_map = lambda g, b: (g, 0, 0)
            o_map = lambda g, b: (b, g)

        kernel = functools.partial(_dense_group_kernel, dg=dg, n_ary=n_ary, emb_dim=emb)
        cost = pl.CostEstimate(
            flops=2 * n_rows * num_tables * n_ary * emb,
            transcendentals=0,
            bytes_accessed=(n_rows * num_tables * n_ary * itemx
                            + num_tables * vb * emb * itemw
                            + n_rows * num_tables * emb * itemo))
        out2d = pl.pallas_call(
            kernel,
            out_shape=jax.ShapeDtypeStruct((n_rows, num_tables * emb), self.out_dtype),
            grid=grid,
            in_specs=[
                pl.BlockSpec((bt, dg, n_ary), x_map),
                pl.BlockSpec((dg, vb, emb), w_map),    # V axis blocked to vb, block 0 only
            ],
            out_specs=pl.BlockSpec((bt, dg * emb), o_map),
            compiler_params=self._compiler_params(dims),
            cost_estimate=cost,
        )(x3, self.weights)
        return out2d.reshape(n_rows, num_tables, emb)  # free reshape (trailing dims contiguous)

    # ---- sparse path: idx2 (n_rows, d_tables) int ---------------------------
    def _sparse_call(self, idx2):
        n_rows, d_tables = idx2.shape
        num_tables, vocab, emb = self.weights.shape
        assert d_tables == num_tables
        itemw = jnp.dtype(self.weight_dtype).itemsize
        itemo = jnp.dtype(self.out_dtype).itemsize

        def per_row(dg):
            return (2 * _round_up(dg, 128) * 4                 # idx block
                    + 2 * _round_up(dg * emb, 128) * itemo     # out block
                    + _round_up(vocab, 128) * (itemw + 4)      # in-kernel one-hot + iota
                    + _round_up(emb, 128) * 4)                 # per-digit f32 result

        dg = self._pick_dg(num_tables, vocab, per_row)
        n_groups = num_tables // dg
        w_block_bytes = 2 * dg * _round_up(vocab, 8) * _round_up(emb, 128) * itemw
        bt = self._pick_batch_tile(n_rows, per_row(dg), w_block_bytes)
        n_btiles = (n_rows + bt - 1) // bt
        grid, dims, batch_leading = self._grid_order(n_groups, n_btiles)

        # (n_rows, D) -> (n_groups, n_rows, dg): group axis leads so the idx block's minor
        # dim equals dg (static, lane-legal) for every group. Tiny int32 transpose.
        idx3 = idx2.astype(jnp.int32).reshape(n_rows, n_groups, dg).transpose(1, 0, 2)

        if batch_leading:
            i_map = lambda b, g: (g, b, 0)
            w_map = lambda b, g: (g, 0, 0)
            o_map = lambda b, g: (b, g)
        else:
            i_map = lambda g, b: (g, b, 0)
            w_map = lambda g, b: (g, 0, 0)
            o_map = lambda g, b: (b, g)

        kernel = functools.partial(_sparse_group_kernel, dg=dg, emb_dim=emb)
        # TODO(synk): for large vocabularies replace the one-hot matmul with a scalar-prefetch /
        #             manual-DMA row gather (O(B*E) instead of O(B*V*E)).
        cost = pl.CostEstimate(
            flops=2 * n_rows * num_tables * vocab * emb,
            transcendentals=0,
            bytes_accessed=(n_rows * num_tables * 4
                            + num_tables * vocab * emb * itemw
                            + n_rows * num_tables * emb * itemo))
        out2d = pl.pallas_call(
            kernel,
            out_shape=jax.ShapeDtypeStruct((n_rows, num_tables * emb), self.out_dtype),
            grid=grid,
            in_specs=[
                pl.BlockSpec((1, bt, dg), i_map),
                pl.BlockSpec((dg, vocab, emb), w_map),
            ],
            out_specs=pl.BlockSpec((bt, dg * emb), o_map),
            compiler_params=self._compiler_params(dims),
            cost_estimate=cost,
        )(idx3, self.weights)
        return out2d.reshape(n_rows, num_tables, emb)

    # ---- public forwards -----------------------------------------------------
    def forward_dense_input(self, x):
        assert x.ndim == 3, f"unexpected dimension size: {x.ndim}"
        n_batch, n_digits, n_ary = x.shape
        if n_ary > self.num_embeddings:
            raise ValueError(f"invalid input size: {n_ary} > {self.num_embeddings}")
        if isinstance(self.n_seq_len, int):
            assert n_digits == self.n_seq_len
            return self._dense_call(x)
        # Shared table: identical math at every position -> fold positions into rows.
        out = self._dense_call(x.reshape(n_batch * n_digits, 1, n_ary))
        return out.reshape(n_batch, n_digits, self.embedding_dim)

    def forward_sparse_input(self, x):
        assert x.ndim == 2, f"unexpected dimension size: {x.ndim}"
        n_batch, n_digits = x.shape
        if isinstance(self.n_seq_len, int):
            assert n_digits == self.n_seq_len
            return self._sparse_call(x)
        out = self._sparse_call(x.reshape(n_batch * n_digits, 1))
        return out.reshape(n_batch, n_digits, self.embedding_dim)

    def forward(self, x, is_dense_input=False):
        if is_dense_input:
            return self.forward_dense_input(x)
        return self.forward_sparse_input(x)


if __name__ == "__main__":
    key = jax.random.PRNGKey(0)
    keys = jax.random.split(key, 10)

    # ---- A) ModuleList case, small shapes: dense + sparse -------------------
    n_batch, n_digits, n_ary = 8, 6, 10
    num_embeddings, embedding_dim = 16, 32

    model = PositionAwareEmbeddingPallas(
        n_seq_len=n_digits, num_embeddings=num_embeddings,
        embedding_dim=embedding_dim, key=keys[0])

    x_dense = jax.random.uniform(keys[1], (n_batch, n_digits, n_ary), dtype=jnp.float32)
    x_sparse = jax.random.randint(keys[2], (n_batch, n_digits), 0, num_embeddings,
                                  dtype=jnp.int32)

    out_dense = jax.block_until_ready(model.forward(x_dense, is_dense_input=True))
    out_sparse = jax.block_until_ready(model.forward(x_sparse, is_dense_input=False))

    w_f32 = model.weights.astype(jnp.float32)
    ref_dense = jnp.einsum("bdn,dne->bde", x_dense, w_f32[:, :n_ary, :])
    ref_sparse = w_f32[jnp.arange(n_digits)[None, :], x_sparse]

    assert out_dense.shape == (n_batch, n_digits, embedding_dim)
    assert out_sparse.shape == (n_batch, n_digits, embedding_dim)
    assert jnp.allclose(out_dense, ref_dense, atol=1e-5), "dense path mismatch"
    assert jnp.allclose(out_sparse, ref_sparse, atol=1e-5), "sparse path mismatch"

    # ---- B) multi-group dense (grid over digit groups, Vb < V) ---------------
    model_b = PositionAwareEmbeddingPallas(
        n_seq_len=16, num_embeddings=64, embedding_dim=32, key=keys[3],
        digits_per_group=8)
    x_b = jax.random.uniform(keys[4], (8, 16, 10), dtype=jnp.float32)
    out_b = jax.block_until_ready(model_b.forward(x_b, is_dense_input=True))
    ref_b = jnp.einsum("bdn,dne->bde", x_b,
                       model_b.weights.astype(jnp.float32)[:, :10, :])
    assert jnp.allclose(out_b, ref_b, atol=1e-5), "multi-group dense mismatch"

    # ---- C) batch-tiled dense (batch grid axis, parallel) --------------------
    model_c = PositionAwareEmbeddingPallas(
        n_seq_len=n_digits, num_embeddings=num_embeddings,
        embedding_dim=embedding_dim, key=keys[0], batch_tile=16)
    x_c = jax.random.uniform(keys[5], (64, n_digits, n_ary), dtype=jnp.float32)
    out_c = jax.block_until_ready(model_c.forward(x_c, is_dense_input=True))
    ref_c = jnp.einsum("bdn,dne->bde", x_c,
                       model_c.weights.astype(jnp.float32)[:, :n_ary, :])
    assert jnp.allclose(out_c, ref_c, atol=1e-5), "batch-tiled dense mismatch"

    # ---- D) sparse, multi-group + batch-tiled --------------------------------
    model_d = PositionAwareEmbeddingPallas(
        n_seq_len=16, num_embeddings=32, embedding_dim=32, key=keys[6],
        digits_per_group=8, batch_tile=8)
    x_d = jax.random.randint(keys[7], (32, 16), 0, 32, dtype=jnp.int32)
    out_d = jax.block_until_ready(model_d.forward(x_d, is_dense_input=False))
    ref_d = model_d.weights.astype(jnp.float32)[jnp.arange(16)[None, :], x_d]
    assert jnp.allclose(out_d, ref_d, atol=1e-5), "tiled sparse mismatch"

    # ---- E) bf16 weight storage (f32 MXU accumulation) -----------------------
    model_e = PositionAwareEmbeddingPallas(
        n_seq_len=n_digits, num_embeddings=num_embeddings,
        embedding_dim=embedding_dim, key=keys[0], weight_dtype=jnp.bfloat16)
    out_e = jax.block_until_ready(model_e.forward(x_dense, is_dense_input=True))
    ref_e = jnp.einsum("bdn,dne->bde",
                       x_dense.astype(jnp.bfloat16).astype(jnp.float32),
                       model_e.weights.astype(jnp.float32)[:, :n_ary, :])
    assert jnp.allclose(out_e, ref_e, atol=1e-2), "bf16 dense path mismatch"

    # ---- F) shared-table case (n_seq_len=None) --------------------------------
    model_f = PositionAwareEmbeddingPallas(
        n_seq_len=None, num_embeddings=num_embeddings,
        embedding_dim=embedding_dim, key=keys[8])
    x_f_dense = jax.random.uniform(keys[9], (4, 5, n_ary), dtype=jnp.float32)
    x_f_sparse = jax.random.randint(keys[2], (4, 5), 0, num_embeddings, dtype=jnp.int32)
    w0 = model_f.weights.astype(jnp.float32)[0]
    out_f_dense = jax.block_until_ready(model_f.forward(x_f_dense, is_dense_input=True))
    out_f_sparse = jax.block_until_ready(model_f.forward(x_f_sparse, is_dense_input=False))
    assert jnp.allclose(out_f_dense, jnp.einsum("bdn,ne->bde", x_f_dense, w0[:n_ary]),
                        atol=1e-5), "shared-table dense mismatch"
    assert jnp.allclose(out_f_sparse, w0[x_f_sparse], atol=1e-5), "shared-table sparse mismatch"

    print("KERNEL_OK")
</pallas_src>

<mosaic_0001>
module attributes {stable_mosaic.version = 11 : i64} {
  func.func @_dense_group_kernel(%arg0: i32, %arg1: i32, %arg2: memref<8x6x10xf32, #tpu.memory_space<vmem>>, %arg3: memref<6x16x32xf32, #tpu.memory_space<vmem>>, %arg4: memref<8x192xf32, #tpu.memory_space<vmem>>) attributes {dimension_semantics = [#tpu.dimension_semantics<parallel>, #tpu.dimension_semantics<arbitrary>], iteration_bounds = array<i64: 1, 1>, scalar_prefetch = 0 : i64, scratch_operands = 0 : i64, tpu.core_type = #tpu.core_type<tc>, window_params = [{transform_indices = @transform_0, window_bounds = array<i64: 8, 6, 10>}, {transform_indices = @transform_1, window_bounds = array<i64: 6, 16, 32>}, {transform_indices = @transform_2, window_bounds = array<i64: 8, 192>}]} {
    %c0 = arith.constant 0 : index
    %c0_0 = arith.constant 0 : index
    %c0_1 = arith.constant 0 : index
    %0 = vector.load %arg3[%c0, %c0_0, %c0_1] : memref<6x16x32xf32, #tpu.memory_space<vmem>>, vector<1x10x32xf32>
    %1 = vector.shape_cast %0 : vector<1x10x32xf32> to vector<10x32xf32>
    %c0_2 = arith.constant 0 : index
    %c0_3 = arith.constant 0 : index
    %c0_4 = arith.constant 0 : index
    %2 = vector.load %arg2[%c0_2, %c0_3, %c0_4] : memref<8x6x10xf32, #tpu.memory_space<vmem>>, vector<8x1x10xf32>
    %3 = vector.shape_cast %2 : vector<8x1x10xf32> to vector<8x10xf32>
    %cst = arith.constant dense<0.000000e+00> : vector<8x32xf32>
    %4 = tpu.matmul %3, %1, %cst {dimension_numbers = #tpu.dot_dimension_numbers<[1], [0], [0], [1], [0, 0, 1, 1], [], []>} : vector<8x10xf32>, vector<10x32xf32>, vector<8x32xf32> -> vector<8x32xf32>
    %c0_5 = arith.constant 0 : index
    %c0_6 = arith.constant 0 : index
    %5 = vector.load %arg4[%c0_5, %c0_6] : memref<8x192xf32, #tpu.memory_space<vmem>>, vector<8x32xf32>
    tpu.vector_store %arg4[%c0_5, %c0_6], %4 {strides = array<i32>} : memref<8x192xf32, #tpu.memory_space<vmem>>, vector<8x32xf32>,
    %c1 = arith.constant 1 : index
    %c0_7 = arith.constant 0 : index
    %c0_8 = arith.constant 0 : index
    %6 = vector.load %arg3[%c1, %c0_7, %c0_8] : memref<6x16x32xf32, #tpu.memory_space<vmem>>, vector<1x10x32xf32>
    %7 = vector.shape_cast %6 : vector<1x10x32xf32> to vector<10x32xf32>
    %c0_9 = arith.constant 0 : index
    %c1_10 = arith.constant 1 : index
    %c0_11 = arith.constant 0 : index
    %8 = vector.load %arg2[%c0_9, %c1_10, %c0_11] : memref<8x6x10xf32, #tpu.memory_space<vmem>>, vector<8x1x10xf32>
    %9 = vector.shape_cast %8 : vector<8x1x10xf32> to vector<8x10xf32>
    %cst_12 = arith.constant dense<0.000000e+00> : vector<8x32xf32>
    %10 = tpu.matmul %9, %7, %cst_12 {dimension_numbers = #tpu.dot_dimension_numbers<[1], [0], [0], [1], [0, 0, 1, 1], [], []>} : vector<8x10xf32>, vector<10x32xf32>, vector<8x32xf32> -> vector<8x32xf32>
    %c0_13 = arith.constant 0 : index
    %c32 = arith.constant 32 : index
    %11 = vector.load %arg4[%c0_13, %c32] : memref<8x192xf32, #tpu.memory_space<vmem>>, vector<8x32xf32>
    tpu.vector_store %arg4[%c0_13, %c32], %10 {strides = array<i32>} : memref<8x192xf32, #tpu.memory_space<vmem>>, vector<8x32xf32>,
    %c2 = arith.constant 2 : index
    %c0_14 = arith.constant 0 : index
    %c0_15 = arith.constant 0 : index
    %12 = vector.load %arg3[%c2, %c0_14, %c0_15] : memref<6x16x32xf32, #tpu.memory_space<vmem>>, vector<1x10x32xf32>
    %13 = vector.shape_cast %12 : vector<1x10x32xf32> to vector<10x32xf32>
    %c0_16 = arith.constant 0 : index
    %c2_17 = arith.constant 2 : index
    %c0_18 = arith.constant 0 : index
    %14 = vector.load %arg2[%c0_16, %c2_17, %c0_18] : memref<8x6x10xf32, #tpu.memory_space<vmem>>, vector<8x1x10xf32>
    %15 = vector.shape_cast %14 : vector<8x1x10xf32> to vector<8x10xf32>
    %cst_19 = arith.constant dense<0.000000e+00> : vector<8x32xf32>
    %16 = tpu.matmul %15, %13, %cst_19 {dimension_numbers = #tpu.dot_dimension_numbers<[1], [0], [0], [1], [0, 0, 1, 1], [], []>} : vector<8x10xf32>, vector<10x32xf32>, vector<8x32xf32> -> vector<8x32xf32>
    %c0_20 = arith.constant 0 : index
    %c64 = arith.constant 64 : index
    %17 = vector.load %arg4[%c0_20, %c64] : memref<8x192xf32, #tpu.memory_space<vmem>>, vector<8x32xf32>
    tpu.vector_store %arg4[%c0_20, %c64], %16 {strides = array<i32>} : memref<8x192xf32, #tpu.memory_space<vmem>>, vector<8x32xf32>,
    %c3 = arith.constant 3 : index
    %c0_21 = arith.constant 0 : index
    %c0_22 = arith.constant 0 : index
    %18 = vector.load %arg3[%c3, %c0_21, %c0_22] : memref<6x16x32xf32, #tpu.memory_space<vmem>>, vector<1x10x32xf32>
    %19 = vector.shape_cast %18 : vector<1x10x32xf32> to vector<10x32xf32>
    %c0_23 = arith.constant 0 : index
    %c3_24 = arith.constant 3 : index
    %c0_25 = arith.constant 0 : index
    %20 = vector.load %arg2[%c0_23, %c3_24, %c0_25] : memref<8x6x10xf32, #tpu.memory_space<vmem>>, vector<8x1x10xf32>
    %21 = vector.shape_cast %20 : vector<8x1x10xf32> to vector<8x10xf32>
    %cst_26 = arith.constant dense<0.000000e+00> : vector<8x32xf32>
    %22 = tpu.matmul %21, %19, %cst_26 {dimension_numbers = #tpu.dot_dimension_numbers<[1], [0], [0], [1], [0, 0, 1, 1], [], []>} : vector<8x10xf32>, vector<10x32xf32>, vector<8x32xf32> -> vector<8x32xf32>
    %c0_27 = arith.constant 0 : index
    %c96 = arith.constant 96 : index
    %23 = vector.load %arg4[%c0_27, %c96] : memref<8x192xf32, #tpu.memory_space<vmem>>, vector<8x32xf32>
    tpu.vector_store %arg4[%c0_27, %c96], %22 {strides = array<i32>} : memref<8x192xf32, #tpu.memory_space<vmem>>, vector<8x32xf32>,
    %c4 = arith.constant 4 : index
    %c0_28 = arith.constant 0 : index
    %c0_29 = arith.constant 0 : index
    %24 = vector.load %arg3[%c4, %c0_28, %c0_29] : memref<6x16x32xf32, #tpu.memory_space<vmem>>, vector<1x10x32xf32>
    %25 = vector.shape_cast %24 : vector<1x10x32xf32> to vector<10x32xf32>
    %c0_30 = arith.constant 0 : index
    %c4_31 = arith.constant 4 : index
    %c0_32 = arith.constant 0 : index
    %26 = vector.load %arg2[%c0_30, %c4_31, %c0_32] : memref<8x6x10xf32, #tpu.memory_space<vmem>>, vector<8x1x10xf32>
    %27 = vector.shape_cast %26 : vector<8x1x10xf32> to vector<8x10xf32>
    %cst_33 = arith.constant dense<0.000000e+00> : vector<8x32xf32>
    %28 = tpu.matmul %27, %25, %cst_33 {dimension_numbers = #tpu.dot_dimension_numbers<[1], [0], [0], [1], [0, 0, 1, 1], [], []>} : vector<8x10xf32>, vector<10x32xf32>, vector<8x32xf32> -> vector<8x32xf32>
    %c0_34 = arith.constant 0 : index
    %c128 = arith.constant 128 : index
    %29 = vector.load %arg4[%c0_34, %c128] : memref<8x192xf32, #tpu.memory_space<vmem>>, vector<8x32xf32>
    tpu.vector_store %arg4[%c0_34, %c128], %28 {strides = array<i32>} : memref<8x192xf32, #tpu.memory_space<vmem>>, vector<8x32xf32>,
    %c5 = arith.constant 5 : index
    %c0_35 = arith.constant 0 : index
    %c0_36 = arith.constant 0 : index
    %30 = vector.load %arg3[%c5, %c0_35, %c0_36] : memref<6x16x32xf32, #tpu.memory_space<vmem>>, vector<1x10x32xf32>
    %31 = vector.shape_cast %30 : vector<1x10x32xf32> to vector<10x32xf32>
    %c0_37 = arith.constant 0 : index
    %c5_38 = arith.constant 5 : index
    %c0_39 = arith.constant 0 : index
    %32 = vector.load %arg2[%c0_37, %c5_38, %c0_39] : memref<8x6x10xf32, #tpu.memory_space<vmem>>, vector<8x1x10xf32>
    %33 = vector.shape_cast %32 : vector<8x1x10xf32> to vector<8x10xf32>
    %cst_40 = arith.constant dense<0.000000e+00> : vector<8x32xf32>
    %34 = tpu.matmul %33, %31, %cst_40 {dimension_numbers = #tpu.dot_dimension_numbers<[1], [0], [0], [1], [0, 0, 1, 1], [], []>} : vector<8x10xf32>, vector<10x32xf32>, vector<8x32xf32> -> vector<8x32xf32>
    %c0_41 = arith.constant 0 : index
    %c160 = arith.constant 160 : index
    %35 = vector.load %arg4[%c0_41, %c160] : memref<8x192xf32, #tpu.memory_space<vmem>>, vector<8x32xf32>
    tpu.vector_store %arg4[%c0_41, %c160], %34 {strides = array<i32>} : memref<8x192xf32, #tpu.memory_space<vmem>>, vector<8x32xf32>,
    return
  }
  func.func @transform_0(%arg0: i32, %arg1: i32) -> (i32, i32, i32) {
    %c0_i32 = arith.constant 0 : i32
    %c0_i32_0 = arith.constant 0 : i32
    return %arg0, %arg1, %c0_i32 : i32, i32, i32
  }
  func.func @transform_1(%arg0: i32, %arg1: i32) -> (i32, i32, i32) {
    %c0_i32 = arith.constant 0 : i32
    %c0_i32_0 = arith.constant 0 : i32
    %c0_i32_1 = arith.constant 0 : i32
    return %arg1, %c0_i32, %c0_i32_0 : i32, i32, i32
  }
  func.func @transform_2(%arg0: i32, %arg1: i32) -> (i32, i32) {
    %c0_i32 = arith.constant 0 : i32
    return %arg0, %arg1 : i32, i32
  }
}

</mosaic_0001>

<llo_original>
// kernel: tpu_custom_call.1
$region0: #{tpu_custom_call.1}
  #allocation0 [shape = 'u32[]', space=smem, size = 0x4, offset = 0x4, fixed_abs, tag = 'smem constant byte address 0x4 - core index']
  #allocation1 [shape = 'u32[72,128]{1,0:T(1,128)}', space=vmem, size = 0x9000, scoped, tag = 'internal scratch']
  %s0 = inlined_call_operand.vmem [shape: f32[8,6,10], index: 0, kind: input, shape index: {}]
  %s1 = inlined_call_operand.vmem [shape: f32[6,16,32], index: 1, kind: input, shape index: {}]
  %s2 = inlined_call_operand.hbm [shape: f32[8,192], index: 2, kind: output, shape index: {}]
  %s3 = sld [smem:[#allocation0]]
  $region18: #{tpu_custom_call.1} parent=0
    _
  %s5 = ssub.s32 1, %s3
  %s6 = scalar_select 0, %s5, %s3
  $region1: #{tpu_custom_call.1} parent=0
    #allocation2 [shape = 'u8[8192]{0}', space=vmem, size = 0x2000, scoped, tag = 'output window, operand 0, single buffered']
    #allocation3 [shape = 's32[1]{0}', space=sflag, size = 0x4, scoped, tag = 'scoped memory for tpu_custom_call.1']
    %7 = vsyncpa [#allocation3], 0
    // Predicated region
    $region2: #{tpu_custom_call.1} parent=1 // pred_check
      _
    $region3: #{tpu_custom_call.1} parent=1 // pred_check_branch
      %9 = sbr.rel (0) target = $region5
    $region4: #{tpu_custom_call.1} parent=1 // pred_region
      _
    $region5: #{tpu_custom_call.1} parent=1 // pred_fallthru
      _
    // Predicated region
    $region6: #{tpu_custom_call.1} parent=1 // pred_check
      _
    $region7: #{tpu_custom_call.1} parent=1 // pred_check_branch
      %11 = sbr.rel (0) target = $region9
    $region8: #{tpu_custom_call.1} parent=1 // pred_region
      _
    $region9: #{tpu_custom_call.1} parent=1 // pred_fallthru
      _
    %v12 = vld [vmem:[%s1] sm:$0xff]
    %v13 = vld [vmem:[%s1 + $0x8] sm:$0x3]
    %v14 = vld [vmem:[%s0] sm:$0x1]
    %v15 = vld [vmem:[%s0 + $0x8] sm:$0x1]
    %v16 = vld [vmem:[%s0 + $0x10] sm:$0x1]
    %v17 = vld [vmem:[%s0 + $0x18] sm:$0x1]
    %v18 = vld [vmem:[%s0 + $0x20] sm:$0x1]
    %v19 = vld [vmem:[%s0 + $0x28] sm:$0x1]
    %v20 = vld [vmem:[%s0 + $0x30] sm:$0x1]
    %v21 = vld [vmem:[%s0 + $0x38] sm:$0x1]
    %v30 = vrot.slane %v15, 7
    %vm31 = vcmask 1041409
    %v32 = vsel %vm31, %v30, %v14
    %v33 = vrot.slane %v16, 6
    %vm34 = vcmask 1042434
    %v35 = vsel %vm34, %v33, %v32
    %v36 = vrot.slane %v17, 5
    %vm37 = vcmask 1043459
    %v38 = vsel %vm37, %v36, %v35
    %v39 = vrot.slane %v18, 4
    %vm40 = vcmask 1044484
    %v41 = vsel %vm40, %v39, %v38
    %v42 = vrot.slane %v19, 3
    %vm43 = vcmask 1045509
    %v44 = vsel %vm43, %v42, %v41
    %v45 = vrot.slane %v20, 2
    %vm46 = vcmask 1046534
    %v47 = vsel %vm46, %v45, %v44
    %v48 = vrot.slane %v21, 1
    %vm49 = vcmask 1047559
    %v50 = vsel %vm49, %v48, %v47
    %vm51 = vcmask 80896
    %v52 = vsel %vm51, %v50, 0
    %vm54 = vcmask 1041408
    %v56 = vsel %vm54, %v13, 0
    %58 = vmatpush.msra.mxu0 0.0
    %59 = vmatpush.msra.mxu0 0.0
    %60 = vmatpush.msra.mxu0 0.0
    %61 = vmatpush.msra.mxu0 0.0
    %62 = vmatpush.msra.mxu0 0.0
    %63 = vmatpush.msra.mxu0 0.0
    %64 = vmatpush.msra.mxu0 0.0
    %65 = vmatpush.msra.mxu0 0.0
    %66 = vmatpush.msra.mxu0 0.0
    %67 = vmatpush.msra.mxu0 0.0
    %68 = vmatpush.msra.mxu0 0.0
    %69 = vmatpush.msra.mxu0 0.0
    %70 = vmatpush.msra.mxu0 0.0
    %71 = vmatpush.msra.mxu0 0.0
    %72 = vmatpush.msra.mxu0 %v56
    %73 = vmatpush.msra.mxu0 %v12
    %74 = vmatmul.f32.gmra.mxu0 %v52
    %v75 = vpop.f32.mrf.mxu0
    %v76 = vadd.f32 0.0, %v75
    %77 = vdwg.mxu0
    %vm78 = vcmask 261120
    %79 = vst.msk [vmem:[#allocation2] sm:$0xff] %vm78, %v76
    %s80 = scalar_lea.vmem %s1, 16
    %v81 = vld [vmem:[%s80] sm:$0xff]
    %v82 = vld [vmem:[%s80 + $0x8] sm:$0x3]
    %v83 = vld [vmem:[%s0 + $0x1] sm:$0x1]
    %v84 = vld [vmem:[%s0 + $0x9] sm:$0x1]
    %v85 = vld [vmem:[%s0 + $0x11] sm:$0x1]
    %v86 = vld [vmem:[%s0 + $0x19] sm:$0x1]
    %v87 = vld [vmem:[%s0 + $0x21] sm:$0x1]
    %v88 = vld [vmem:[%s0 + $0x29] sm:$0x1]
    %v89 = vld [vmem:[%s0 + $0x31] sm:$0x1]
    %v90 = vld [vmem:[%s0 + $0x39] sm:$0x1]
    %v99 = vrot.slane %v84, 7
    %v100 = vsel %vm31, %v99, %v83
    %v101 = vrot.slane %v85, 6
    %v102 = vsel %vm34, %v101, %v100
    %v103 = vrot.slane %v86, 5
    %v104 = vsel %vm37, %v103, %v102
    %v105 = vrot.slane %v87, 4
    %v106 = vsel %vm40, %v105, %v104
    %v107 = vrot.slane %v88, 3
    %v108 = vsel %vm43, %v107, %v106
    %v109 = vrot.slane %v89, 2
    %v110 = vsel %vm46, %v109, %v108
    %v111 = vrot.slane %v90, 1
    %v112 = vsel %vm49, %v111, %v110
    %v113 = vsel %vm51, %v112, 0
    %v116 = vsel %vm54, %v82, 0
    %118 = vmatpush.msra.mxu0 0.0
    %119 = vmatpush.msra.mxu0 0.0
    %120 = vmatpush.msra.mxu0 0.0
    %121 = vmatpush.msra.mxu0 0.0
    %122 = vmatpush.msra.mxu0 0.0
    %123 = vmatpush.msra.mxu0 0.0
    %124 = vmatpush.msra.mxu0 0.0
    %125 = vmatpush.msra.mxu0 0.0
    %126 = vmatpush.msra.mxu0 0.0
    %127 = vmatpush.msra.mxu0 0.0
    %128 = vmatpush.msra.mxu0 0.0
    %129 = vmatpush.msra.mxu0 0.0
    %130 = vmatpush.msra.mxu0 0.0
    %131 = vmatpush.msra.mxu0 0.0
    %132 = vmatpush.msra.mxu0 %v116
    %133 = vmatpush.msra.mxu0 %v81
    %134 = vmatmul.f32.gmra.mxu0 %v113
    %v135 = vpop.f32.mrf.mxu0
    %v136 = vadd.f32 0.0, %v135
    %137 = vdwg.mxu0
    %139 = vrot.lane.b32.xlu0 %v136, 32
    %v140 = vpop.permute.xlu0 %139
    %vm142 = vcmask 523520
    %143 = vst.msk [vmem:[#allocation2] sm:$0xff] %vm142, %v140
    %s144 = scalar_lea.vmem %s1, 32
    %v145 = vld [vmem:[%s144] sm:$0xff]
    %v146 = vld [vmem:[%s144 + $0x8] sm:$0x3]
    %v147 = vld [vmem:[%s0 + $0x2] sm:$0x1]
    %v148 = vld [vmem:[%s0 + $0xa] sm:$0x1]
    %v149 = vld [vmem:[%s0 + $0x12] sm:$0x1]
    %v150 = vld [vmem:[%s0 + $0x1a] sm:$0x1]
    %v151 = vld [vmem:[%s0 + $0x22] sm:$0x1]
    %v152 = vld [vmem:[%s0 + $0x2a] sm:$0x1]
    %v153 = vld [vmem:[%s0 + $0x32] sm:$0x1]
    %v154 = vld [vmem:[%s0 + $0x3a] sm:$0x1]
    %v163 = vrot.slane %v148, 7
    %v164 = vsel %vm31, %v163, %v147
    %v165 = vrot.slane %v149, 6
    %v166 = vsel %vm34, %v165, %v164
    %v167 = vrot.slane %v150, 5
    %v168 = vsel %vm37, %v167, %v166
    %v169 = vrot.slane %v151, 4
    %v170 = vsel %vm40, %v169, %v168
    %v171 = vrot.slane %v152, 3
    %v172 = vsel %vm43, %v171, %v170
    %v173 = vrot.slane %v153, 2
    %v174 = vsel %vm46, %v173, %v172
    %v175 = vrot.slane %v154, 1
    %v176 = vsel %vm49, %v175, %v174
    %v177 = vsel %vm51, %v176, 0
    %v180 = vsel %vm54, %v146, 0
    %182 = vmatpush.msra.mxu0 0.0
    %183 = vmatpush.msra.mxu0 0.0
    %184 = vmatpush.msra.mxu0 0.0
    %185 = vmatpush.msra.mxu0 0.0
    %186 = vmatpush.msra.mxu0 0.0
    %187 = vmatpush.msra.mxu0 0.0
    %188 = vmatpush.msra.mxu0 0.0
    %189 = vmatpush.msra.mxu0 0.0
    %190 = vmatpush.msra.mxu0 0.0
    %191 = vmatpush.msra.mxu0 0.0
    %192 = vmatpush.msra.mxu0 0.0
    %193 = vmatpush.msra.mxu0 0.0
    %194 = vmatpush.msra.mxu0 0.0
    %195 = vmatpush.msra.mxu0 0.0
    %196 = vmatpush.msra.mxu0 %v180
    %197 = vmatpush.msra.mxu0 %v145
    %198 = vmatmul.f32.gmra.mxu0 %v177
    %v199 = vpop.f32.mrf.mxu0
    %v200 = vadd.f32 0.0, %v199
    %201 = vdwg.mxu0
    %203 = vrot.lane.b32.xlu0 %v200, 64
    %v204 = vpop.permute.xlu0 %203
    %vm206 = vcmask 785920
    %207 = vst.msk [vmem:[#allocation2] sm:$0xff] %vm206, %v204
    %s208 = scalar_lea.vmem %s1, 48
    %v209 = vld [vmem:[%s208] sm:$0xff]
    %v210 = vld [vmem:[%s208 + $0x8] sm:$0x3]
    %v211 = vld [vmem:[%s0 + $0x3] sm:$0x1]
    %v212 = vld [vmem:[%s0 + $0xb] sm:$0x1]
    %v213 = vld [vmem:[%s0 + $0x13] sm:$0x1]
    %v214 = vld [vmem:[%s0 + $0x1b] sm:$0x1]
    %v215 = vld [vmem:[%s0 + $0x23] sm:$0x1]
    %v216 = vld [vmem:[%s0 + $0x2b] sm:$0x1]
    %v217 = vld [vmem:[%s0 + $0x33] sm:$0x1]
    %v218 = vld [vmem:[%s0 + $0x3b] sm:$0x1]
    %v227 = vrot.slane %v212, 7
    %v228 = vsel %vm31, %v227, %v211
    %v229 = vrot.slane %v213, 6
    %v230 = vsel %vm34, %v229, %v228
    %v231 = vrot.slane %v214, 5
    %v232 = vsel %vm37, %v231, %v230
    %v233 = vrot.slane %v215, 4
    %v234 = vsel %vm40, %v233, %v232
    %v235 = vrot.slane %v216, 3
    %v236 = vsel %vm43, %v235, %v234
    %v237 = vrot.slane %v217, 2
    %v238 = vsel %vm46, %v237, %v236
    %v239 = vrot.slane %v218, 1
    %v240 = vsel %vm49, %v239, %v238
    %v241 = vsel %vm51, %v240, 0
    %v244 = vsel %vm54, %v210, 0
    %246 = vmatpush.msra.mxu0 0.0
    %247 = vmatpush.msra.mxu0 0.0
    %248 = vmatpush.msra.mxu0 0.0
    %249 = vmatpush.msra.mxu0 0.0
    %250 = vmatpush.msra.mxu0 0.0
    %251 = vmatpush.msra.mxu0 0.0
    %252 = vmatpush.msra.mxu0 0.0
    %253 = vmatpush.msra.mxu0 0.0
    %254 = vmatpush.msra.mxu0 0.0
    %255 = vmatpush.msra.mxu0 0.0
    %256 = vmatpush.msra.mxu0 0.0
    %257 = vmatpush.msra.mxu0 0.0
    %258 = vmatpush.msra.mxu0 0.0
    %259 = vmatpush.msra.mxu0 0.0
    %260 = vmatpush.msra.mxu0 %v244
    %261 = vmatpush.msra.mxu0 %v209
    %262 = vmatmul.f32.gmra.mxu0 %v241
    %v263 = vpop.f32.mrf.mxu0
    %v264 = vadd.f32 0.0, %v263
    %265 = vdwg.mxu0
    %267 = vrot.lane.b32.xlu0 %v264, 96
    %v268 = vpop.permute.xlu0 %267
    %vm270 = vcmask 1048320
    %271 = vst.msk [vmem:[#allocation2] sm:$0xff] %vm270, %v268
    %s272 = scalar_lea.vmem %s1, 64
    %v273 = vld [vmem:[%s272] sm:$0xff]
    %v274 = vld [vmem:[%s272 + $0x8] sm:$0x3]
    %v275 = vld [vmem:[%s0 + $0x4] sm:$0x1]
    %v276 = vld [vmem:[%s0 + $0xc] sm:$0x1]
    %v277 = vld [vmem:[%s0 + $0x14] sm:$0x1]
    %v278 = vld [vmem:[%s0 + $0x1c] sm:$0x1]
    %v279 = vld [vmem:[%s0 + $0x24] sm:$0x1]
    %v280 = vld [vmem:[%s0 + $0x2c] sm:$0x1]
    %v281 = vld [vmem:[%s0 + $0x34] sm:$0x1]
    %v282 = vld [vmem:[%s0 + $0x3c] sm:$0x1]
    %v291 = vrot.slane %v276, 7
    %v292 = vsel %vm31, %v291, %v275
    %v293 = vrot.slane %v277, 6
    %v294 = vsel %vm34, %v293, %v292
    %v295 = vrot.slane %v278, 5
    %v296 = vsel %vm37, %v295, %v294
    %v297 = vrot.slane %v279, 4
    %v298 = vsel %vm40, %v297, %v296
    %v299 = vrot.slane %v280, 3
    %v300 = vsel %vm43, %v299, %v298
    %v301 = vrot.slane %v281, 2
    %v302 = vsel %vm46, %v301, %v300
    %v303 = vrot.slane %v282, 1
    %v304 = vsel %vm49, %v303, %v302
    %v305 = vsel %vm51, %v304, 0
    %v308 = vsel %vm54, %v274, 0
    %310 = vmatpush.msra.mxu0 0.0
    %311 = vmatpush.msra.mxu0 0.0
    %312 = vmatpush.msra.mxu0 0.0
    %313 = vmatpush.msra.mxu0 0.0
    %314 = vmatpush.msra.mxu0 0.0
    %315 = vmatpush.msra.mxu0 0.0
    %316 = vmatpush.msra.mxu0 0.0
    %317 = vmatpush.msra.mxu0 0.0
    %318 = vmatpush.msra.mxu0 0.0
    %319 = vmatpush.msra.mxu0 0.0
    %320 = vmatpush.msra.mxu0 0.0
    %321 = vmatpush.msra.mxu0 0.0
    %322 = vmatpush.msra.mxu0 0.0
    %323 = vmatpush.msra.mxu0 0.0
    %324 = vmatpush.msra.mxu0 %v308
    %325 = vmatpush.msra.mxu0 %v273
    %326 = vmatmul.f32.gmra.mxu0 %v305
    %v327 = vpop.f32.mrf.mxu0
    %v328 = vadd.f32 0.0, %v327
    %329 = vdwg.mxu0
    %330 = vst.msk [vmem:[#allocation2 + $0x8] sm:$0xff] %vm78, %v328
    %s331 = scalar_lea.vmem %s1, 80
    %v332 = vld [vmem:[%s331] sm:$0xff]
    %v333 = vld [vmem:[%s331 + $0x8] sm:$0x3]
    %v334 = vld [vmem:[%s0 + $0x5] sm:$0x1]
    %v335 = vld [vmem:[%s0 + $0xd] sm:$0x1]
    %v336 = vld [vmem:[%s0 + $0x15] sm:$0x1]
    %v337 = vld [vmem:[%s0 + $0x1d] sm:$0x1]
    %v338 = vld [vmem:[%s0 + $0x25] sm:$0x1]
    %v339 = vld [vmem:[%s0 + $0x2d] sm:$0x1]
    %v340 = vld [vmem:[%s0 + $0x35] sm:$0x1]
    %v341 = vld [vmem:[%s0 + $0x3d] sm:$0x1]
    %v350 = vrot.slane %v335, 7
    %v351 = vsel %vm31, %v350, %v334
    %v352 = vrot.slane %v336, 6
    %v353 = vsel %vm34, %v352, %v351
    %v354 = vrot.slane %v337, 5
    %v355 = vsel %vm37, %v354, %v353
    %v356 = vrot.slane %v338, 4
    %v357 = vsel %vm40, %v356, %v355
    %v358 = vrot.slane %v339, 3
    %v359 = vsel %vm43, %v358, %v357
    %v360 = vrot.slane %v340, 2
    %v361 = vsel %vm46, %v360, %v359
    %v362 = vrot.slane %v341, 1
    %v363 = vsel %vm49, %v362, %v361
    %v364 = vsel %vm51, %v363, 0
    %v367 = vsel %vm54, %v333, 0
    %369 = vmatpush.msra.mxu0 0.0
    %370 = vmatpush.msra.mxu0 0.0
    %371 = vmatpush.msra.mxu0 0.0
    %372 = vmatpush.msra.mxu0 0.0
    %373 = vmatpush.msra.mxu0 0.0
    %374 = vmatpush.msra.mxu0 0.0
    %375 = vmatpush.msra.mxu0 0.0
    %376 = vmatpush.msra.mxu0 0.0
    %377 = vmatpush.msra.mxu0 0.0
    %378 = vmatpush.msra.mxu0 0.0
    %379 = vmatpush.msra.mxu0 0.0
    %380 = vmatpush.msra.mxu0 0.0
    %381 = vmatpush.msra.mxu0 0.0
    %382 = vmatpush.msra.mxu0 0.0
    %383 = vmatpush.msra.mxu0 %v367
    %384 = vmatpush.msra.mxu0 %v332
    %385 = vmatmul.f32.gmra.mxu0 %v364
    %v386 = vpop.f32.mrf.mxu0
    %v387 = vadd.f32 0.0, %v386
    %388 = vdwg.mxu0
    %390 = vrot.lane.b32.xlu0 %v387, 32
    %v391 = vpop.permute.xlu0 %390
    %393 = vst.msk [vmem:[#allocation2 + $0x8] sm:$0xff] %vm142, %v391
    // Predicated region
    $region10: #{tpu_custom_call.1} parent=1 // pred_check
      _
    $region11: #{tpu_custom_call.1} parent=1 // pred_check_branch
      %395 = sbr.rel (0) target = $region13
    $region12: #{tpu_custom_call.1} parent=1 // pred_region
      %397 = vsyncadd [#allocation3], 0
      %s399 = sshll.u32 [#allocation2], 4
      %s400 = int_to_ptr.vmem [resolvable:$true] %s399
      %s401 = sshll.u32 %s2, 4
      %s402 = int_to_ptr.hbm [resolvable:$true] %s401
      %404 = dma.vmem_to_hbm [thread:$0]  %s400, 256, %s402, [#allocation3]
    $region13: #{tpu_custom_call.1} parent=1 // pred_fallthru
      _
    // Predicated region
    $region14: #{tpu_custom_call.1} parent=1 // pred_check
      _
    $region15: #{tpu_custom_call.1} parent=1 // pred_check_branch
      %406 = sbr.rel (0) target = $region17
    $region16: #{tpu_custom_call.1} parent=1 // pred_region
      %408 = dma.done [#allocation3], 256
    $region17: #{tpu_custom_call.1} parent=1 // pred_fallthru
      _
    %409 = vsyncpa [#allocation3], 1

</llo_original>
